<compile_context>
chip_gen: v7x
topology: tpu7x:2x2x1
jax: 0.10.0
libtpu: 0.0.40
codegen_flags: <defaults>
</compile_context>

<pallas_src>
import functools
import math

import jax
import jax.numpy as jnp
from jax.experimental import pallas as pl
from jax.experimental.pallas import tpu as pltpu


_SQRT_2_OVER_PI = math.sqrt(2.0 / math.pi)


def _gelu_tanh(x):
    # GeLU tanh approximation:
    # 0.5 * x * (1 + tanh(sqrt(2/pi) * (x + 0.044715 * x^3)))
    return 0.5 * x * (1.0 + jnp.tanh(_SQRT_2_OVER_PI * (x + 0.044715 * x * x * x)))


def _ffn_kernel(x_ref, w1_ref, b1_ref, w2_ref, b2_ref, o_ref, acc_ref,
                *, gelu_dtype):
    # x_ref:  (TM, E)     w1_ref: (E, Hc)   b1_ref: (1, Hc)
    # w2_ref: (Hc, E)     b2_ref: (1, E)    o_ref:  (TM, E)
    # acc_ref: (TM, E) f32 accumulator across the H (reduction) grid axis.
    h_idx = pl.program_id(1)

    @pl.when(h_idx == 0)
    def _():
        acc_ref[...] = jnp.zeros_like(acc_ref)

    # Up-projection for this H chunk: native-dtype operands straight to the
    # MXU, f32 accumulation.
    h = jnp.dot(x_ref[...], w1_ref[...], preferred_element_type=jnp.float32)
    h = h + b1_ref[...].astype(jnp.float32)

    # GeLU on the (TM, Hc) slab only (bf16 on v6e/v7x bf16 runs, f32 otherwise).
    h = _gelu_tanh(h.astype(gelu_dtype))

    # Down-projection chunk, accumulated in f32.  Cast to the weight dtype so
    # bf16 weights keep the MXU at full bf16 rate (no-op for f32).
    acc_ref[...] += jnp.dot(h.astype(w2_ref.dtype), w2_ref[...],
                            preferred_element_type=jnp.float32)

    @pl.when(h_idx == pl.num_programs(1) - 1)
    def _():
        o_ref[...] = (acc_ref[...] + b2_ref[...].astype(jnp.float32)
                      ).astype(o_ref.dtype)


def _round_up(n, m):
    return ((n + m - 1) // m) * m


def _device_kind():
    try:
        return jax.devices()[0].device_kind.lower()
    except Exception:
        return ""


def _vmem_budget_bytes():
    # Per-generation VMEM cap (per TensorCore), with headroom for Mosaic
    # internal scratch: ~102 MiB on v5e/v6e (128 MiB), ~51 MiB on v7x (64 MiB).
    try:
        cap = int(pltpu.get_tpu_info().vmem_capacity_bytes)
    except Exception:
        cap = 64 << 20  # conservative fallback (v7x per-core size)
    return int(0.8 * cap)


def _default_tm():
    # v5e MXU is 4x128x128: tm=256 gives no MXU-edge benefit there but doubles
    # the hidden slab and per-tile latency; 256 suits v6e/v7x's 256x256 MXU.
    return 128 if "v5" in _device_kind() else 256


def _pick_hidden_chunk(H, E, tm, x_isz, w_isz, out_isz, budget):
    """Largest H chunk (divisor of H, lane-aligned) whose working set fits."""
    def need(hc):
        return (2 * tm * E * x_isz                 # x tile (double-buffered)
                + 2 * tm * E * out_isz             # out tile (double-buffered)
                + 2 * (E * hc + hc * E) * w_isz    # W1/W2 chunks (double-buf)
                + 2 * (hc + E) * 4                 # bias chunks
                + tm * E * 4                       # f32 accumulator scratch
                + 2 * tm * hc * 4)                 # hidden slab + headroom

    candidates = [H] + [c for c in (8192, 4096, 2048, 1024, 512, 256, 128)
                        if c < H and H % c == 0]
    for hc in candidates:
        if need(hc) <= budget:
            return hc
    return candidates[-1]


def feed_forward(x, w1, b1, w2, b2, *, tm=None, compute_dtype=None):
    """x: [batch, seq, E]; w1: [E, 4E]; b1: [4E]; w2: [4E, E]; b2: [E].

    tm: row tile (auto per chip if None).  compute_dtype: e.g. jnp.bfloat16 to
    cast activations/weights for full-rate MXU (accumulation stays f32).
    """
    B, S, E = x.shape
    E_in, H = w1.shape
    assert E_in == E and w2.shape == (H, E)
    assert b1.shape == (H,) and b2.shape == (E,)

    out_dtype = x.dtype
    if compute_dtype is not None:
        x = x.astype(compute_dtype)
        w1 = w1.astype(compute_dtype)
        w2 = w2.astype(compute_dtype)

    M = B * S
    if tm is None:
        tm = _default_tm()
    # Keep at least 2 row tiles when possible so v7x's 2 TensorCores both get
    # work (harmless extra grid step on 1-TC chips).  Sublane-aligned (8).
    half = max(8, _round_up(-(-M // 2), 8))
    tm_eff = max(8, min(tm, half))
    M_pad = _round_up(M, tm_eff)

    x2d = x.reshape(M, E)
    if M_pad != M:
        # TODO(synk): masked in-kernel tail store instead of host pad + slice.
        x2d = jnp.pad(x2d, ((0, M_pad - M), (0, 0)))
    b1_2d = b1.reshape(1, H)
    b2_2d = b2.reshape(1, E)

    x_isz = jnp.dtype(x.dtype).itemsize
    w_isz = jnp.dtype(w1.dtype).itemsize
    out_isz = jnp.dtype(out_dtype).itemsize

    budget = _vmem_budget_bytes()
    Hc = _pick_hidden_chunk(H, E, tm_eff, x_isz, w_isz, out_isz,
                            int(0.85 * budget))
    grid = (M_pad // tm_eff, H // Hc)

    # GeLU dtype: bf16 only when weights are bf16 and the chip has a bf16
    # VPU/EUP path (v6e/v7x); v5e and f32 runs keep f32.
    gelu_dtype = (jnp.bfloat16
                  if (w1.dtype == jnp.bfloat16 and "v5" not in _device_kind())
                  else jnp.float32)

    cost = pl.CostEstimate(
        flops=4 * M_pad * E * H,                 # two matmuls
        transcendentals=M_pad * H,               # tanh in GeLU
        bytes_accessed=(M_pad * E * (x_isz + out_isz)
                        + 2 * grid[0] * E * H * w_isz
                        + (H + E) * 4),
    )

    kernel = functools.partial(_ffn_kernel, gelu_dtype=gelu_dtype)

    out2d = pl.pallas_call(
        kernel,
        out_shape=jax.ShapeDtypeStruct((M_pad, E), out_dtype),
        grid_spec=pltpu.PrefetchScalarGridSpec(
            num_scalar_prefetch=0,
            grid=grid,
            in_specs=[
                pl.BlockSpec((tm_eff, E), lambda i, h: (i, 0)),   # x rows
                pl.BlockSpec((E, Hc), lambda i, h: (0, h)),       # W1 chunk
                pl.BlockSpec((1, Hc), lambda i, h: (0, h)),       # b1 chunk
                pl.BlockSpec((Hc, E), lambda i, h: (h, 0)),       # W2 chunk
                pl.BlockSpec((1, E), lambda i, h: (0, 0)),        # b2
            ],
            out_specs=pl.BlockSpec((tm_eff, E), lambda i, h: (i, 0)),
            scratch_shapes=[pltpu.VMEM((tm_eff, E), jnp.float32)],
        ),
        compiler_params=pltpu.CompilerParams(
            dimension_semantics=("parallel", "arbitrary"),
            vmem_limit_bytes=budget,
        ),
        cost_estimate=cost,
    )(x2d, w1, b1_2d, w2, b2_2d)

    if M_pad != M:
        out2d = out2d[:M]
    return out2d.reshape(B, S, E)


def feed_forward_ref(x, w1, b1, w2, b2):
    h = jnp.dot(x, w1) + b1
    h = _gelu_tanh(h)
    return jnp.dot(h, w2) + b2


if __name__ == "__main__":
    # Small config consistent with the module: emb_dim=32 -> hidden=128.
    batch, seq, emb_dim = 2, 8, 32
    hidden = 4 * emb_dim

    key = jax.random.PRNGKey(0)
    kx, kw1, kb1, kw2, kb2 = jax.random.split(key, 5)

    x = jax.random.normal(kx, (batch, seq, emb_dim), dtype=jnp.float32)
    # Deterministic synthetic parameters (nn.Linear-like scale).
    w1 = jax.random.uniform(kw1, (emb_dim, hidden), dtype=jnp.float32,
                            minval=-1.0, maxval=1.0) / math.sqrt(emb_dim)
    b1 = jax.random.uniform(kb1, (hidden,), dtype=jnp.float32,
                            minval=-1.0, maxval=1.0) / math.sqrt(emb_dim)
    w2 = jax.random.uniform(kw2, (hidden, emb_dim), dtype=jnp.float32,
                            minval=-1.0, maxval=1.0) / math.sqrt(hidden)
    b2 = jax.random.uniform(kb2, (emb_dim,), dtype=jnp.float32,
                            minval=-1.0, maxval=1.0) / math.sqrt(hidden)

    out = feed_forward(x, w1, b1, w2, b2)
    out = jax.block_until_ready(out)
    ref = feed_forward_ref(x, w1, b1, w2, b2)
    assert out.shape == (batch, seq, emb_dim)
    assert jnp.allclose(out, ref, atol=1e-5, rtol=1e-5), "mismatch vs reference"

    # Ragged row count (M = 15 not a multiple of the tile) exercises padding.
    x_r = jax.random.normal(kx, (3, 5, emb_dim), dtype=jnp.float32)
    out_r = jax.block_until_ready(feed_forward(x_r, w1, b1, w2, b2))
    ref_r = feed_forward_ref(x_r, w1, b1, w2, b2)
    assert out_r.shape == (3, 5, emb_dim)
    assert jnp.allclose(out_r, ref_r, atol=1e-5, rtol=1e-5), "ragged mismatch"

    print("KERNEL_OK")
</pallas_src>

<mosaic_0001>
module attributes {stable_mosaic.version = 11 : i64} {
  func.func @_ffn_kernel(%arg0: i32, %arg1: i32, %arg2: memref<8x32xf32, #tpu.memory_space<vmem>>, %arg3: memref<32x128xf32, #tpu.memory_space<vmem>>, %arg4: memref<1x128xf32, #tpu.memory_space<vmem>>, %arg5: memref<128x32xf32, #tpu.memory_space<vmem>>, %arg6: memref<1x32xf32, #tpu.memory_space<vmem>>, %arg7: memref<8x32xf32, #tpu.memory_space<vmem>>, %arg8: memref<8x32xf32, #tpu.memory_space<vmem>>) attributes {dimension_semantics = [#tpu.dimension_semantics<parallel>, #tpu.dimension_semantics<arbitrary>], iteration_bounds = array<i64: 2, 1>, scalar_prefetch = 0 : i64, scratch_operands = 1 : i64, tpu.core_type = #tpu.core_type<tc>, window_params = [{transform_indices = @transform_0, window_bounds = array<i64: 8, 32>}, {transform_indices = @transform_1, window_bounds = array<i64: 32, 128>}, {transform_indices = @transform_2, window_bounds = array<i64: 1, 128>}, {transform_indices = @transform_3, window_bounds = array<i64: 128, 32>}, {pipeline_mode = #tpu.pipeline_mode<synchronous>, transform_indices = @transform_4, window_bounds = array<i64: 1, 32>}, {transform_indices = @transform_5, window_bounds = array<i64: 8, 32>}]} {
    %c0_i32 = arith.constant 0 : i32
    %0 = arith.cmpi eq, %arg1, %c0_i32 : i32
    %1 = arith.extui %0 : i1 to i32
    %c0_i32_0 = arith.constant 0 : i32
    %2 = arith.cmpi ne, %1, %c0_i32_0 : i32
    scf.if %2 {
      %cst_19 = arith.constant 0.000000e+00 : f32
      %30 = vector.broadcast %cst_19 : f32 to vector<8x32xf32>
      %c0_20 = arith.constant 0 : index
      %c0_21 = arith.constant 0 : index
      %31 = vector.load %arg8[%c0_20, %c0_21] : memref<8x32xf32, #tpu.memory_space<vmem>>, vector<8x32xf32>
      tpu.vector_store %arg8[%c0_20, %c0_21], %30 {strides = array<i32>} : memref<8x32xf32, #tpu.memory_space<vmem>>, vector<8x32xf32>,
    } else {
    }
    %c0 = arith.constant 0 : index
    %c0_1 = arith.constant 0 : index
    %3 = vector.load %arg2[%c0, %c0_1] : memref<8x32xf32, #tpu.memory_space<vmem>>, vector<8x32xf32>
    %c0_2 = arith.constant 0 : index
    %c0_3 = arith.constant 0 : index
    %4 = vector.load %arg3[%c0_2, %c0_3] : memref<32x128xf32, #tpu.memory_space<vmem>>, vector<32x128xf32>
    %cst = arith.constant dense<0.000000e+00> : vector<8x128xf32>
    %5 = tpu.matmul %3, %4, %cst {dimension_numbers = #tpu.dot_dimension_numbers<[1], [0], [0], [1], [0, 0, 1, 1], [], []>} : vector<8x32xf32>, vector<32x128xf32>, vector<8x128xf32> -> vector<8x128xf32>
    %c0_4 = arith.constant 0 : index
    %c0_5 = arith.constant 0 : index
    %6 = vector.load %arg4[%c0_4, %c0_5] : memref<1x128xf32, #tpu.memory_space<vmem>>, vector<1x128xf32>
    %7 = vector.broadcast %6 : vector<1x128xf32> to vector<8x128xf32>
    %8 = arith.addf %5, %7 : vector<8x128xf32>
    %cst_6 = arith.constant 5.000000e-01 : f32
    %9 = vector.broadcast %cst_6 : f32 to vector<8x128xf32>
    %10 = arith.mulf %9, %8 : vector<8x128xf32>
    %cst_7 = arith.constant 4.471500e-02 : f32
    %11 = vector.broadcast %cst_7 : f32 to vector<8x128xf32>
    %12 = arith.mulf %11, %8 : vector<8x128xf32>
    %13 = arith.mulf %12, %8 : vector<8x128xf32>
    %14 = arith.mulf %13, %8 : vector<8x128xf32>
    %15 = arith.addf %8, %14 : vector<8x128xf32>
    %cst_8 = arith.constant 0.797884583 : f32
    %16 = vector.broadcast %cst_8 : f32 to vector<8x128xf32>
    %17 = arith.mulf %16, %15 : vector<8x128xf32>
    %18 = math.tanh %17 : vector<8x128xf32>
    %cst_9 = arith.constant 1.000000e+00 : f32
    %19 = vector.broadcast %cst_9 : f32 to vector<8x128xf32>
    %20 = arith.addf %19, %18 : vector<8x128xf32>
    %21 = arith.mulf %10, %20 : vector<8x128xf32>
    %c0_10 = arith.constant 0 : index
    %c0_11 = arith.constant 0 : index
    %22 = vector.load %arg8[%c0_10, %c0_11] : memref<8x32xf32, #tpu.memory_space<vmem>>, vector<8x32xf32>
    %c0_12 = arith.constant 0 : index
    %c0_13 = arith.constant 0 : index
    %23 = vector.load %arg5[%c0_12, %c0_13] : memref<128x32xf32, #tpu.memory_space<vmem>>, vector<128x32xf32>
    %cst_14 = arith.constant dense<0.000000e+00> : vector<8x32xf32>
    %24 = tpu.matmul %21, %23, %cst_14 {dimension_numbers = #tpu.dot_dimension_numbers<[1], [0], [0], [1], [0, 0, 1, 1], [], []>} : vector<8x128xf32>, vector<128x32xf32>, vector<8x32xf32> -> vector<8x32xf32>
    %25 = arith.addf %22, %24 : vector<8x32xf32>
    %c0_15 = arith.constant 0 : index
    %c0_16 = arith.constant 0 : index
    %26 = vector.load %arg8[%c0_15, %c0_16] : memref<8x32xf32, #tpu.memory_space<vmem>>, vector<8x32xf32>
    tpu.vector_store %arg8[%c0_15, %c0_16], %25 {strides = array<i32>} : memref<8x32xf32, #tpu.memory_space<vmem>>, vector<8x32xf32>,
    %c0_i32_17 = arith.constant 0 : i32
    %27 = arith.cmpi eq, %arg1, %c0_i32_17 : i32
    %28 = arith.extui %27 : i1 to i32
    %c0_i32_18 = arith.constant 0 : i32
    %29 = arith.cmpi ne, %28, %c0_i32_18 : i32
    scf.if %29 {
      %c0_19 = arith.constant 0 : index
      %c0_20 = arith.constant 0 : index
      %30 = vector.load %arg8[%c0_19, %c0_20] : memref<8x32xf32, #tpu.memory_space<vmem>>, vector<8x32xf32>
      %c0_21 = arith.constant 0 : index
      %c0_22 = arith.constant 0 : index
      %31 = vector.load %arg6[%c0_21, %c0_22] : memref<1x32xf32, #tpu.memory_space<vmem>>, vector<1x32xf32>
      %32 = vector.broadcast %31 : vector<1x32xf32> to vector<8x32xf32>
      %33 = arith.addf %30, %32 : vector<8x32xf32>
      %c0_23 = arith.constant 0 : index
      %c0_24 = arith.constant 0 : index
      %34 = vector.load %arg7[%c0_23, %c0_24] : memref<8x32xf32, #tpu.memory_space<vmem>>, vector<8x32xf32>
      tpu.vector_store %arg7[%c0_23, %c0_24], %33 {strides = array<i32>} : memref<8x32xf32, #tpu.memory_space<vmem>>, vector<8x32xf32>,
    } else {
    }
    return
  }
  func.func @transform_0(%arg0: i32, %arg1: i32) -> (i32, i32) {
    %c0_i32 = arith.constant 0 : i32
    %c0_i32_0 = arith.constant 0 : i32
    return %arg0, %c0_i32 : i32, i32
  }
  func.func @transform_1(%arg0: i32, %arg1: i32) -> (i32, i32) {
    %c0_i32 = arith.constant 0 : i32
    %c0_i32_0 = arith.constant 0 : i32
    return %c0_i32, %arg1 : i32, i32
  }
  func.func @transform_2(%arg0: i32, %arg1: i32) -> (i32, i32) {
    %c0_i32 = arith.constant 0 : i32
    %c0_i32_0 = arith.constant 0 : i32
    return %c0_i32, %arg1 : i32, i32
  }
  func.func @transform_3(%arg0: i32, %arg1: i32) -> (i32, i32) {
    %c0_i32 = arith.constant 0 : i32
    %c0_i32_0 = arith.constant 0 : i32
    return %arg1, %c0_i32 : i32, i32
  }
  func.func @transform_4(%arg0: i32, %arg1: i32) -> (i32, i32) {
    %c0_i32 = arith.constant 0 : i32
    %c0_i32_0 = arith.constant 0 : i32
    %c0_i32_1 = arith.constant 0 : i32
    return %c0_i32, %c0_i32_0 : i32, i32
  }
  func.func @transform_5(%arg0: i32, %arg1: i32) -> (i32, i32) {
    %c0_i32 = arith.constant 0 : i32
    %c0_i32_0 = arith.constant 0 : i32
    return %arg0, %c0_i32 : i32, i32
  }
}

</mosaic_0001>

<llo_original>
// kernel: tpu_custom_call.1
$region0: #{tpu_custom_call.1}
  #allocation0 [shape = 'u32[]', space=smem, size = 0x4, offset = 0x4, fixed_abs, tag = 'smem constant byte address 0x4 - core index']
  #allocation1 [shape = 'u32[144,128]{1,0:T(1,128)}', space=vmem, size = 0x12000, scoped, tag = 'internal scratch']
  #allocation2 [shape = 'f32[8,32]{1,0:T(8,128)}', space=vmem, size = 0x1000, scoped, tag = 'scratch operand']
  %s0 = inlined_call_operand.vmem [shape: f32[16,32], index: 0, kind: input, shape index: {}]
  %s1 = inlined_call_operand.vmem [shape: f32[32,128], index: 1, kind: input, shape index: {}]
  %s2 = inlined_call_operand.vmem [shape: f32[1,128], index: 2, kind: input, shape index: {}]
  %s3 = inlined_call_operand.vmem [shape: f32[128,32], index: 3, kind: input, shape index: {}]
  %s4 = inlined_call_operand.vmem [shape: f32[1,32], index: 4, kind: input, shape index: {}]
  %s5 = inlined_call_operand.hbm [shape: f32[16,32], index: 5, kind: output, shape index: {}]
  %s6 = sld [smem:[#allocation0]]
  $region61: #{tpu_custom_call.1} parent=0
    _
  %s8 = ssub.s32 1, %s6
  %s9 = scalar_select 0, %s8, %s6
  $region1: #{tpu_custom_call.1} parent=0
    #allocation3 [shape = 'u8[8192]{0}', space=vmem, size = 0x2000, scoped, tag = 'output window, operand 0']
    #allocation4 [shape = 's32[2]{0}', space=sflag, size = 0x8, scoped, tag = 'scoped memory for tpu_custom_call.1']
    %10 = vsyncpa [#allocation4], 0
    %s11 = scalar_lea.sflag [#allocation4], 1
    %12 = vsyncpa %s11, 0
    loop: start=0, step=1, limit=4
    $region2: #{tpu_custom_call.1} parent=1 // loop_pre_header
      _
    $region3: #{tpu_custom_call.1} parent=1 // loop_header
      %s14 = sphi 0, %s18
      %p15 = scmp.ge.s32.totalorder %s14, 4
      %s21 = sphi 0, %s33
      %s22 = sphi 0, %s29
      %s23 = sphi 0, %s21
      %s24 = sphi 0, %s22
      %s25 = sphi 0, %s23
      %s26 = sphi 0, %s24
      %s36 = sphi 0, %s38
      %s39 = sphi 0, %s36
      %s40 = sphi 0, %s39
      %s56 = sphi 0, %s40
      %s62 = sphi 0, %s64
      %s65 = sphi 0, %s62
      %s66 = sphi 0, %s65
      %s82 = sphi 0, %s66
      %s88 = sphi 0, %s90
      %s91 = sphi 0, %s88
      %s92 = sphi 0, %s91
      %s108 = sphi 0, %s92
      %s114 = sphi 0, %s116
      %s117 = sphi 0, %s114
      %s118 = sphi 0, %s117
      %s134 = sphi 0, %s118
      %s138 = sphi 0, %s138
      %s140 = sphi 0, %s138
      %s141 = sphi 0, %s140
      %s155 = sphi 0, %s141
      %s161 = sphi 0, %s163
      %s164 = sphi 0, %s161
      %s165 = sphi 0, %s164
      %s181 = sphi 0, %s165
    $region4: #{tpu_custom_call.1} parent=1 // loop_header_branch
      %17 = sbr.rel (%p15) target = $region8
    $region5: #{tpu_custom_call.1} parent=1 // loop_body
      %s19 = ssub.s32 %s14, 1
      %s20 = ssub.s32 %s14, 2
      %s27 = sadd.s32 1, %s22
      %p28 = scmp.ge.s32.totalorder %s27, 1
      %s29 = scalar_select %p28, 0, %s27
      %s30 = sadd.s32 1, %s21
      %s31 = scalar_select %p28, %s30, %s21
      %p32 = scmp.ge.s32.totalorder %s31, 2
      %s33 = scalar_select %p32, 0, %s31
      %s34 = ssub.s32 %s21, %s33
      %p35 = scmp.eq.s32.totalorder %s34, 0
      %s37 = sadd.s32 %s36, 1
      %s38 = scalar_select %p35, %s36, %s37
      %p41 = pneg %p35
      %p42 = scmp.eq.s32.totalorder %s14, 1
      %p43 = por %p41, %p42
      %p44 = scmp.ne.s32.totalorder %s36, %s39
      %p45 = scmp.eq.s32.totalorder %s14, 0
      %p46 = por %p44, %p45
      %p47 = scmp.ne.s32.totalorder %s36, %s39
      %p48 = scmp.eq.s32.totalorder %s19, 1
      %p49 = por %p47, %p48
      %p50 = scmp.ne.s32.totalorder %s39, %s40
      %p51 = scmp.eq.s32.totalorder %s19, 0
      %p52 = por %p50, %p51
      %p53 = scmp.ne.s32.totalorder %s39, %s40
      %p54 = scmp.eq.s32.totalorder %s20, 1
      %p55 = por %p53, %p54
      %p57 = scmp.ne.s32.totalorder %s40, %s56
      %p58 = scmp.eq.s32.totalorder %s20, 0
      %p59 = por %p57, %p58
      %s60 = ssub.s32 %s22, %s29
      %p61 = scmp.eq.s32.totalorder %s60, 0
      %s63 = sadd.s32 %s62, 1
      %s64 = scalar_select %p61, %s62, %s63
      %p67 = pneg %p61
      %p68 = scmp.eq.s32.totalorder %s14, 1
      %p69 = por %p67, %p68
      %p70 = scmp.ne.s32.totalorder %s62, %s65
      %p71 = scmp.eq.s32.totalorder %s14, 0
      %p72 = por %p70, %p71
      %p73 = scmp.ne.s32.totalorder %s62, %s65
      %p74 = scmp.eq.s32.totalorder %s19, 1
      %p75 = por %p73, %p74
      %p76 = scmp.ne.s32.totalorder %s65, %s66
      %p77 = scmp.eq.s32.totalorder %s19, 0
      %p78 = por %p76, %p77
      %p79 = scmp.ne.s32.totalorder %s65, %s66
      %p80 = scmp.eq.s32.totalorder %s20, 1
      %p81 = por %p79, %p80
      %p83 = scmp.ne.s32.totalorder %s66, %s82
      %p84 = scmp.eq.s32.totalorder %s20, 0
      %p85 = por %p83, %p84
      %s86 = ssub.s32 %s22, %s29
      %p87 = scmp.eq.s32.totalorder %s86, 0
      %s89 = sadd.s32 %s88, 1
      %s90 = scalar_select %p87, %s88, %s89
      %p93 = pneg %p87
      %p94 = scmp.eq.s32.totalorder %s14, 1
      %p95 = por %p93, %p94
      %p96 = scmp.ne.s32.totalorder %s88, %s91
      %p97 = scmp.eq.s32.totalorder %s14, 0
      %p98 = por %p96, %p97
      %p99 = scmp.ne.s32.totalorder %s88, %s91
      %p100 = scmp.eq.s32.totalorder %s19, 1
      %p101 = por %p99, %p100
      %p102 = scmp.ne.s32.totalorder %s91, %s92
      %p103 = scmp.eq.s32.totalorder %s19, 0
      %p104 = por %p102, %p103
      %p105 = scmp.ne.s32.totalorder %s91, %s92
      %p106 = scmp.eq.s32.totalorder %s20, 1
      %p107 = por %p105, %p106
      %p109 = scmp.ne.s32.totalorder %s92, %s108
      %p110 = scmp.eq.s32.totalorder %s20, 0
      %p111 = por %p109, %p110
      %s112 = ssub.s32 %s22, %s29
      %p113 = scmp.eq.s32.totalorder %s112, 0
      %s115 = sadd.s32 %s114, 1
      %s116 = scalar_select %p113, %s114, %s115
      %p119 = pneg %p113
      %p120 = scmp.eq.s32.totalorder %s14, 1
      %p121 = por %p119, %p120
      %p122 = scmp.ne.s32.totalorder %s114, %s117
      %p123 = scmp.eq.s32.totalorder %s14, 0
      %p124 = por %p122, %p123
      %p125 = scmp.ne.s32.totalorder %s114, %s117
      %p126 = scmp.eq.s32.totalorder %s19, 1
      %p127 = por %p125, %p126
      %p128 = scmp.ne.s32.totalorder %s117, %s118
      %p129 = scmp.eq.s32.totalorder %s19, 0
      %p130 = por %p128, %p129
      %p131 = scmp.ne.s32.totalorder %s117, %s118
      %p132 = scmp.eq.s32.totalorder %s20, 1
      %p133 = por %p131, %p132
      %p135 = scmp.ne.s32.totalorder %s118, %s134
      %p136 = scmp.eq.s32.totalorder %s20, 0
      %p137 = por %p135, %p136
      %s139 = sadd.s32 %s138, 1
      %p142 = scmp.eq.s32.totalorder %s14, 1
      %p143 = scmp.ne.s32.totalorder %s138, %s140
      %p144 = scmp.eq.s32.totalorder %s14, 0
      %p145 = por %p143, %p144
      %p146 = scmp.ne.s32.totalorder %s138, %s140
      %p147 = scmp.eq.s32.totalorder %s19, 1
      %p148 = por %p146, %p147
      %p149 = scmp.ne.s32.totalorder %s140, %s141
      %p150 = scmp.eq.s32.totalorder %s19, 0
      %p151 = por %p149, %p150
      %p152 = scmp.ne.s32.totalorder %s140, %s141
      %p153 = scmp.eq.s32.totalorder %s20, 1
      %p154 = por %p152, %p153
      %p156 = scmp.ne.s32.totalorder %s141, %s155
      %p157 = scmp.eq.s32.totalorder %s20, 0
      %p158 = por %p156, %p157
      %s159 = ssub.s32 %s21, %s33
      %p160 = scmp.eq.s32.totalorder %s159, 0
      %s162 = sadd.s32 %s161, 1
      %s163 = scalar_select %p160, %s161, %s162
      %p166 = pneg %p160
      %p167 = scmp.eq.s32.totalorder %s14, 1
      %p168 = por %p166, %p167
      %p169 = scmp.ne.s32.totalorder %s161, %s164
      %p170 = scmp.eq.s32.totalorder %s14, 0
      %p171 = por %p169, %p170
      %p172 = scmp.ne.s32.totalorder %s161, %s164
      %p173 = scmp.eq.s32.totalorder %s19, 1
      %p174 = por %p172, %p173
      %p175 = scmp.ne.s32.totalorder %s164, %s165
      %p176 = scmp.eq.s32.totalorder %s19, 0
      %p177 = por %p175, %p176
      %p178 = scmp.ne.s32.totalorder %s164, %s165
      %p179 = scmp.eq.s32.totalorder %s20, 1
      %p180 = por %p178, %p179
      %p182 = scmp.ne.s32.totalorder %s165, %s181
      %p183 = scmp.eq.s32.totalorder %s20, 0
      %p184 = por %p182, %p183
      %p185 = scmp.le.s32.totalorder 1, %s14
      %p186 = scmp.lt.s32.totalorder %s14, 3
      %p187 = pnand %p185, %p186
      %p188 = pneg %p187
      // Predicated region
      $region9: #{tpu_custom_call.1} parent=5 // pred_check
        _
      $region10: #{tpu_custom_call.1} parent=5 // pred_check_branch
        %190 = sbr.rel (%p187) target = $region12
      $region11: #{tpu_custom_call.1} parent=5 // pred_region
        %s191 = ssub.s32 %s14, 1
        // Predicated region
        $region13: #{tpu_custom_call.1} parent=11 // pred_check
          %p192 = pneg %p78
        $region14: #{tpu_custom_call.1} parent=11 // pred_check_branch
          %194 = sbr.rel (%p192) target = $region16
        $region15: #{tpu_custom_call.1} parent=11 // pred_region
          %p195 = scmp.lt.s32.totalorder %s24, 0
          %s196 = scalar_select %p195, %s24, 0
          %s197 = smul.addr %s196, 8
          %s198 = scalar_lea.vmem %s1, %s197
        $region16: #{tpu_custom_call.1} parent=11 // pred_fallthru
          _
        // Predicated region
        $region17: #{tpu_custom_call.1} parent=11 // pred_check
          %p199 = pneg %p104
        $region18: #{tpu_custom_call.1} parent=11 // pred_check_branch
          %201 = sbr.rel (%p199) target = $region20
        $region19: #{tpu_custom_call.1} parent=11 // pred_region
          %p202 = scmp.lt.s32.totalorder %s24, 0
          %s203 = scalar_select %p202, %s24, 0
          %s204 = scalar_lea.vmem %s2, %s203
        $region20: #{tpu_custom_call.1} parent=11 // pred_fallthru
          _
        // Predicated region
        $region21: #{tpu_custom_call.1} parent=11 // pred_check
          %p205 = pneg %p130
        $region22: #{tpu_custom_call.1} parent=11 // pred_check_branch
          %207 = sbr.rel (%p205) target = $region24
        $region23: #{tpu_custom_call.1} parent=11 // pred_region
          %s208 = smul.u32 16, %s24
          %p209 = scmp.lt.s32.totalorder %s208, 15
          %s210 = scalar_select %p209, %s208, 15
          %s211 = smul.addr %s210, 8
          %s212 = scalar_lea.vmem %s3, %s211
          %s213 = smul.u32 16, %s24
        $region24: #{tpu_custom_call.1} parent=11 // pred_fallthru
          _
        // Predicated region
        $region25: #{tpu_custom_call.1} parent=11 // pred_check
          %p214 = pneg %p151
        $region26: #{tpu_custom_call.1} parent=11 // pred_check_branch
          %216 = sbr.rel (%p214) target = $region28
        $region27: #{tpu_custom_call.1} parent=11 // pred_region
          _
        $region28: #{tpu_custom_call.1} parent=11 // pred_fallthru
          _
      $region12: #{tpu_custom_call.1} parent=5 // pred_fallthru
        _
      %p217 = scmp.lt.s32.totalorder %s14, 2
      // Predicated region
      $region29: #{tpu_custom_call.1} parent=5 // pred_check
        %p218 = pneg %p217
      $region30: #{tpu_custom_call.1} parent=5 // pred_check_branch
        %220 = sbr.rel (%p218) target = $region32
      $region31: #{tpu_custom_call.1} parent=5 // pred_region
        // Predicated region
        $region33: #{tpu_custom_call.1} parent=31 // pred_check
          %p221 = pneg %p46
        $region34: #{tpu_custom_call.1} parent=31 // pred_check_branch
          %223 = sbr.rel (%p221) target = $region36
        $region35: #{tpu_custom_call.1} parent=31 // pred_region
          %p224 = scmp.lt.s32.totalorder %s21, 1
          %s225 = scalar_select %p224, %s21, 1
          %s226 = smul.addr %s225, 8
          %s227 = scalar_lea.vmem %s0, %s226
        $region36: #{tpu_custom_call.1} parent=31 // pred_fallthru
          _
      $region32: #{tpu_custom_call.1} parent=5 // pred_fallthru
        _
      %p228 = scmp.le.s32.totalorder 1, %s14
      %p229 = scmp.lt.s32.totalorder %s14, 3
      %p230 = pnand %p228, %p229
      %p231 = pneg %p230
      // Predicated region
      $region37: #{tpu_custom_call.1} parent=5 // pred_check
        _
      $region38: #{tpu_custom_call.1} parent=5 // pred_check_branch
        %233 = sbr.rel (%p230) target = $region40
      $region39: #{tpu_custom_call.1} parent=5 // pred_region
        %s234 = ssub.s32 %s14, 1
        %p235 = scmp.lt.s32.totalorder %s23, 1
        %s236 = scalar_select %p235, %s23, 1
        %s237 = smul.addr %s236, 8
        %s238 = scalar_lea.vmem %s0, %s237
        %p239 = pneg %p52
        %p240 = pneg %p49
        %p241 = scmp.lt.s32.totalorder %s24, 0
        %s242 = scalar_select %p241, %s24, 0
        %s243 = smul.addr %s242, 8
        %s244 = scalar_lea.vmem %s1, %s243
        %p245 = pneg %p78
        %p246 = pneg %p75
        %p247 = scmp.lt.s32.totalorder %s24, 0
        %s248 = scalar_select %p247, %s24, 0
        %s249 = scalar_lea.vmem %s2, %s248
        %p250 = pneg %p104
        %p251 = pneg %p101
        %s252 = smul.u32 16, %s24
        %p253 = scmp.lt.s32.totalorder %s252, 15
        %s254 = scalar_select %p253, %s252, 15
        %s255 = smul.addr %s254, 8
        %s256 = scalar_lea.vmem %s3, %s255
        %p257 = pneg %p130
        %p258 = pneg %p127
        %p259 = pneg %p151
        %p260 = pneg %p148
        %p261 = pneg %p177
        %p262 = pneg %p174
        %s263 = sand.u32 %s164, 1
        %s264 = scalar_lea.sflag [#allocation4], %s263
        %s265 = sand.u32 %s164, 1
        %s266 = smul.addr %s265, 8
        %s267 = scalar_lea.vmem [#allocation3], %s266
        %p268 = scmp.lt.s32.totalorder %s23, 1
        %s269 = scalar_select %p268, %s23, 1
        %s270 = smul.addr %s269, 8
        %s271 = scalar_lea.vmem %s0, %s270
        %p272 = scmp.lt.s32.totalorder %s24, 0
        %s273 = scalar_select %p272, %s24, 0
        %s274 = smul.addr %s273, 8
        %s275 = scalar_lea.vmem %s1, %s274
        %p276 = scmp.lt.s32.totalorder %s24, 0
        %s277 = scalar_select %p276, %s24, 0
        %s278 = scalar_lea.vmem %s2, %s277
        %s279 = smul.u32 16, %s24
        %p280 = scmp.lt.s32.totalorder %s279, 15
        %s281 = scalar_select %p280, %s279, 15
        %s282 = smul.addr %s281, 8
        %s283 = scalar_lea.vmem %s3, %s282
        %s284 = smul.u32 16, %s24
        %p285 = scmp.eq.s32.totalorder %s24, 0
        // Predicated region
        $region41: #{tpu_custom_call.1} parent=39 // pred_check
          %p286 = pneg %p285
        $region42: #{tpu_custom_call.1} parent=39 // pred_check_branch
          %288 = sbr.rel (%p286) target = $region44
        $region43: #{tpu_custom_call.1} parent=39 // pred_region
          %vm289 = vcmask 261120
          %290 = vst.msk [vmem:[#allocation2] sm:$0xff] %vm289, 0.0
        $region44: #{tpu_custom_call.1} parent=39 // pred_fallthru
          _
        %v291 = vld [vmem:[%s271] sm:$0xff]
        %v292 = vld [vmem:[%s275] sm:$0xff]
        %v293 = vld [vmem:[%s275 + $0x8] sm:$0xff]
        %v294 = vld [vmem:[%s275 + $0x10] sm:$0xff]
        %v295 = vld [vmem:[%s275 + $0x18] sm:$0xff]
        %v296 = vld [vmem:[%s278] sm:$0x1]
        %v298 = vlaneseq
        %v299 = vshrl.u32 %v298, 7
        %v300 = vsub.s32 0, %v299
        %v301 = vrot.slane %v296, %v300
        %vm303 = vcmask 261120
        %v305 = vsel %vm303, %v291, 0
        %307 = vmatprep.subr.mxu0 0.0
        %308 = vmatpush1.msra.mxu0 %v292
        %309 = vmatprep.subr.mxu0 0.0
        %310 = vmatpush1.msra.mxu0 %v293
        %311 = vmatprep.subr.mxu0 0.0
        %312 = vmatpush1.msra.mxu0 %v294
        %313 = vmatprep.subr.mxu0 0.0
        %314 = vmatpush1.msra.mxu0 %v295
        %315 = vmatprep.subr.mxu0 0.0
        %316 = vmatpush1.msra.mxu0 0.0
        %317 = vmatprep.subr.mxu0 0.0
        %318 = vmatpush1.msra.mxu0 0.0
        %319 = vmatprep.subr.mxu0 0.0
        %320 = vmatpush1.msra.mxu0 0.0
        %321 = vmatprep.subr.mxu0 0.0
        %322 = vmatpush1.msra.mxu0 0.0
        %323 = vmatprep.subr.mxu0 0.0
        %324 = vmatpush1.msra.mxu0 0.0
        %325 = vmatprep.subr.mxu0 0.0
        %326 = vmatpush1.msra.mxu0 0.0
        %327 = vmatprep.subr.mxu0 0.0
        %328 = vmatpush1.msra.mxu0 0.0
        %329 = vmatprep.subr.mxu0 0.0
        %330 = vmatpush1.msra.mxu0 0.0
        %331 = vmatprep.subr.mxu0 0.0
        %332 = vmatpush1.msra.mxu0 0.0
        %333 = vmatprep.subr.mxu0 0.0
        %334 = vmatpush1.msra.mxu0 0.0
        %335 = vmatprep.subr.mxu0 0.0
        %336 = vmatpush1.msra.mxu0 0.0
        %337 = vmatprep.subr.mxu0 0.0
        %338 = vmatpush1.msra.mxu0 0.0
        %339 = vmatprep.subr.mxu0 0.0
        %340 = vmatpush1.msra.mxu0 0.0
        %341 = vmatprep.subr.mxu0 0.0
        %342 = vmatpush1.msra.mxu0 0.0
        %343 = vmatprep.subr.mxu0 0.0
        %344 = vmatpush1.msra.mxu0 0.0
        %345 = vmatprep.subr.mxu0 0.0
        %346 = vmatpush1.msra.mxu0 0.0
        %347 = vmatprep.subr.mxu0 0.0
        %348 = vmatpush1.msra.mxu0 0.0
        %349 = vmatprep.subr.mxu0 0.0
        %350 = vmatpush1.msra.mxu0 0.0
        %351 = vmatprep.subr.mxu0 0.0
        %352 = vmatpush1.msra.mxu0 0.0
        %353 = vmatprep.subr.mxu0 0.0
        %354 = vmatpush1.msra.mxu0 0.0
        %355 = vmatprep.subr.mxu0 0.0
        %356 = vmatpush1.msra.mxu0 0.0
        %357 = vmatprep.subr.mxu0 0.0
        %358 = vmatpush1.msra.mxu0 0.0
        %359 = vmatprep.subr.mxu0 0.0
        %360 = vmatpush1.msra.mxu0 0.0
        %361 = vmatprep.subr.mxu0 0.0
        %362 = vmatpush1.msra.mxu0 0.0
        %363 = vmatprep.subr.mxu0 0.0
        %364 = vmatpush1.msra.mxu0 0.0
        %365 = vmatprep.subr.mxu0 0.0
        %366 = vmatpush1.msra.mxu0 0.0
        %367 = vmatprep.subr.mxu0 0.0
        %368 = vmatpush1.msra.mxu0 0.0
        %369 = vmatprep.subr.mxu0 0.0
        %370 = vmatpush1.msra.mxu0 0.0
        %371 = vmatprep.mubr.f32.mxu0 0.0
        %372 = vmatmul.mubr.f32.gmra.mrb[0].mxu0 %v305
        %v373 = vpop.f32.mrb[0].mxu0
        %v374 = vadd.f32 %v301, %v373
        %v375 = vpop.f32.mrb[0].mxu0
        %376 = vdwg.mxu0
        %v377 = vmul.f32 %v374, 0.5
        %v378 = vmul.f32 %v374, 0.044715
        %v379 = vmul.f32 %v378, %v374
        %v380 = vmul.f32 %v379, %v374
        %v381 = vadd.f32 %v374, %v380
        %v382 = vmul.f32 %v381, 0.7978846
        %v383 = vtanh.pop %v382
        %v384 = vadd.f32 %v383, 1.0
        %v385 = vmul.f32 %v377, %v384
        %v386 = vld [vmem:[#allocation2] sm:$0xff]
        %v387 = vld [vmem:[%s283] sm:$0xff]
        %v388 = vld [vmem:[%s283 + $0x8] sm:$0xff]
        %v389 = vld [vmem:[%s283 + $0x10] sm:$0xff]
        %v390 = vld [vmem:[%s283 + $0x18] sm:$0xff]
        %v391 = vld [vmem:[%s283 + $0x20] sm:$0xff]
        %v392 = vld [vmem:[%s283 + $0x28] sm:$0xff]
        %v393 = vld [vmem:[%s283 + $0x30] sm:$0xff]
        %v394 = vld [vmem:[%s283 + $0x38] sm:$0xff]
        %v395 = vld [vmem:[%s283 + $0x40] sm:$0xff]
        %v396 = vld [vmem:[%s283 + $0x48] sm:$0xff]
        %v397 = vld [vmem:[%s283 + $0x50] sm:$0xff]
        %v398 = vld [vmem:[%s283 + $0x58] sm:$0xff]
        %v399 = vld [vmem:[%s283 + $0x60] sm:$0xff]
        %v400 = vld [vmem:[%s283 + $0x68] sm:$0xff]
        %v401 = vld [vmem:[%s283 + $0x70] sm:$0xff]
        %v402 = vld [vmem:[%s283 + $0x78] sm:$0xff]
        %403 = vmatprep.subr.mxu0 0.0
        %404 = vmatpush1.msra.mxu0 %v387
        %405 = vmatprep.subr.mxu0 0.0
        %406 = vmatpush1.msra.mxu0 %v388
        %407 = vmatprep.subr.mxu0 0.0
        %408 = vmatpush1.msra.mxu0 %v389
        %409 = vmatprep.subr.mxu0 0.0
        %410 = vmatpush1.msra.mxu0 %v390
        %411 = vmatprep.subr.mxu0 0.0
        %412 = vmatpush1.msra.mxu0 %v391
        %413 = vmatprep.subr.mxu0 0.0
        %414 = vmatpush1.msra.mxu0 %v392
        %415 = vmatprep.subr.mxu0 0.0
        %416 = vmatpush1.msra.mxu0 %v393
        %417 = vmatprep.subr.mxu0 0.0
        %418 = vmatpush1.msra.mxu0 %v394
        %419 = vmatprep.subr.mxu0 0.0
        %420 = vmatpush1.msra.mxu0 %v395
        %421 = vmatprep.subr.mxu0 0.0
        %422 = vmatpush1.msra.mxu0 %v396
        %423 = vmatprep.subr.mxu0 0.0
        %424 = vmatpush1.msra.mxu0 %v397
        %425 = vmatprep.subr.mxu0 0.0
        %426 = vmatpush1.msra.mxu0 %v398
        %427 = vmatprep.subr.mxu0 0.0
        %428 = vmatpush1.msra.mxu0 %v399
        %429 = vmatprep.subr.mxu0 0.0
        %430 = vmatpush1.msra.mxu0 %v400
        %431 = vmatprep.subr.mxu0 0.0
        %432 = vmatpush1.msra.mxu0 %v401
        %433 = vmatprep.subr.mxu0 0.0
        %434 = vmatpush1.msra.mxu0 %v402
        %435 = vmatprep.subr.mxu0 0.0
        %436 = vmatpush1.msra.mxu0 0.0
        %437 = vmatprep.subr.mxu0 0.0
        %438 = vmatpush1.msra.mxu0 0.0
        %439 = vmatprep.subr.mxu0 0.0
        %440 = vmatpush1.msra.mxu0 0.0
        %441 = vmatprep.subr.mxu0 0.0
        %442 = vmatpush1.msra.mxu0 0.0
        %443 = vmatprep.subr.mxu0 0.0
        %444 = vmatpush1.msra.mxu0 0.0
        %445 = vmatprep.subr.mxu0 0.0
        %446 = vmatpush1.msra.mxu0 0.0
        %447 = vmatprep.subr.mxu0 0.0
        %448 = vmatpush1.msra.mxu0 0.0
        %449 = vmatprep.subr.mxu0 0.0
        %450 = vmatpush1.msra.mxu0 0.0
        %451 = vmatprep.subr.mxu0 0.0
        %452 = vmatpush1.msra.mxu0 0.0
        %453 = vmatprep.subr.mxu0 0.0
        %454 = vmatpush1.msra.mxu0 0.0
        %455 = vmatprep.subr.mxu0 0.0
        %456 = vmatpush1.msra.mxu0 0.0
        %457 = vmatprep.subr.mxu0 0.0
        %458 = vmatpush1.msra.mxu0 0.0
        %459 = vmatprep.subr.mxu0 0.0
        %460 = vmatpush1.msra.mxu0 0.0
        %461 = vmatprep.subr.mxu0 0.0
        %462 = vmatpush1.msra.mxu0 0.0
        %463 = vmatprep.subr.mxu0 0.0
        %464 = vmatpush1.msra.mxu0 0.0
        %465 = vmatprep.subr.mxu0 0.0
        %466 = vmatpush1.msra.mxu0 0.0
        %467 = vmatprep.mubr.f32.mxu0 0.0
        %468 = vmatmul.mubr.f32.gmra.mrb[0].mxu0 %v385
        %v469 = vpop.f32.mrb[0].mxu0
        %v470 = vadd.f32 0.0, %v469
        %v471 = vpop.f32.mrb[0].mxu0
        %472 = vdwg.mxu0
        %v473 = vadd.f32 %v386, %v470
        %474 = vst.msk [vmem:[#allocation2] sm:$0xff] %vm303, %v473
        // Predicated region
        $region45: #{tpu_custom_call.1} parent=39 // pred_check
          %p475 = pneg %p285
        $region46: #{tpu_custom_call.1} parent=39 // pred_check_branch
          %477 = sbr.rel (%p475) target = $region48
        $region47: #{tpu_custom_call.1} parent=39 // pred_region
          %v478 = vld [vmem:[#allocation2] sm:$0xff]
          %v479 = vld [vmem:[%s4] sm:$0x1]
          %v481 = vlaneseq
          %v482 = vshrl.u32 %v481, 7
          %v483 = vsub.s32 0, %v482
          %v484 = vrot.slane %v479, %v483
          %v486 = vadd.f32 %v478, %v484
          %487 = vst.msk [vmem:[%s267] sm:$0xff] %vm303, %v486
        $region48: #{tpu_custom_call.1} parent=39 // pred_fallthru
          _
        %s488 = sand.u32 %s164, 1
        %s489 = scalar_lea.sflag [#allocation4], %s488
        %s490 = sand.u32 %s164, 1
        %s491 = smul.addr %s490, 8
        %s492 = scalar_lea.vmem [#allocation3], %s491
        // Predicated region
        $region49: #{tpu_custom_call.1} parent=39 // pred_check
          %p493 = pneg %p174
        $region50: #{tpu_custom_call.1} parent=39 // pred_check_branch
          %495 = sbr.rel (%p493) target = $region52
        $region51: #{tpu_custom_call.1} parent=39 // pred_region
          %s497 = ssub.s32 128, 128
          %498 = vsyncadd %s489, %s497
          %s499 = smul.addr %s23, 128
          %s500 = scalar_lea.hbm %s5, %s499
          %s502 = sshll.u32 %s492, 4
          %s503 = int_to_ptr.vmem [resolvable:$true] %s502
          %505 = dma.vmem_to_hbm [thread:$0]  %s503, 128, %s500, %s489
        $region52: #{tpu_custom_call.1} parent=39 // pred_fallthru
          _
      $region40: #{tpu_custom_call.1} parent=5 // pred_fallthru
        _
      %p506 = scmp.le.s32.totalorder 2, %s14
      // Predicated region
      $region53: #{tpu_custom_call.1} parent=5 // pred_check
        %p507 = pneg %p506
      $region54: #{tpu_custom_call.1} parent=5 // pred_check_branch
        %509 = sbr.rel (%p507) target = $region56
      $region55: #{tpu_custom_call.1} parent=5 // pred_region
        %s510 = ssub.s32 %s14, 2
        // Predicated region
        $region57: #{tpu_custom_call.1} parent=55 // pred_check
          %p511 = pneg %p180
        $region58: #{tpu_custom_call.1} parent=55 // pred_check_branch
          %513 = sbr.rel (%p511) target = $region60
        $region59: #{tpu_custom_call.1} parent=55 // pred_region
          %s514 = sand.u32 %s165, 1
          %s515 = scalar_lea.sflag [#allocation4], %s514
          %s516 = sand.u32 %s165, 1
          %s517 = smul.addr %s516, 8
          %s518 = scalar_lea.vmem [#allocation3], %s517
          %519 = dma.done %s515, 128
        $region60: #{tpu_custom_call.1} parent=55 // pred_fallthru
          _
      $region56: #{tpu_custom_call.1} parent=5 // pred_fallthru
        _
    $region6: #{tpu_custom_call.1} parent=1 // loop_footer
      %s18 = sadd.s32 1, %s14
    $region7: #{tpu_custom_call.1} parent=1 // loop_footer_branch
      %13 = sbr.rel target = $region3
    $region8: #{tpu_custom_call.1} parent=1 // loop_exit
      _
    %520 = vsyncpa [#allocation4], 1
    %s521 = scalar_lea.sflag [#allocation4], 1
    %522 = vsyncpa %s521, 1

</llo_original>
